<compile_context>
chip_gen: v6e
topology: v6e:2x2x1
jax: 0.10.0
libtpu: 0.0.40
codegen_flags: <defaults>
</compile_context>

<pallas_src>
import functools

import jax
import jax.numpy as jnp
from jax.experimental import pallas as pl
from jax.experimental.pallas import tpu as pltpu


def _round_up(x, m):
    return ((x + m - 1) // m) * m


# ----------------------------------------------------------------------------
# Fused MLP kernel: whole layer stack on one (TILE_M, D_in_pad) activation
# block.  refs = (w0, b0, w1, b1, ..., w_{L-1}, b_{L-1}, o_ref).
# ----------------------------------------------------------------------------
def _mlp_fused_kernel(x_ref, *refs, num_layers):
    o_ref = refs[-1]
    h = x_ref[...]                                    # (TILE_M, D_in_pad) f32
    for l in range(num_layers):                       # static unroll, L is tiny
        w_ref = refs[2 * l]                           # (D_l_pad, D_{l+1}_pad)
        b_ref = refs[2 * l + 1]                       # (1, D_{l+1}_pad) f32
        lhs = h if h.dtype == w_ref.dtype else h.astype(w_ref.dtype)
        h = jnp.dot(lhs, w_ref[...], preferred_element_type=jnp.float32)
        h = h + b_ref[...]                            # f32 epilogue (VPU), rows broadcast
        if l != num_layers - 1:
            h = jnp.maximum(h, 0.0)                   # ReLU in f32
    o_ref[...] = h.astype(o_ref.dtype)                # lane-dense (TILE_M, D_out_pad)


def mlp_forward_fused(x, w_list, b_list, dim_out, *, tile_m=256):
    """x: (M, dim_in) f32; w_list[l]: (D_l_pad, D_{l+1}_pad) (in,out)-layout
    zero-padded weights; b_list[l]: (1, D_{l+1}_pad) f32 zero-padded biases.
    Returns (M, dim_out)."""
    M, K = x.shape
    L = len(w_list)
    # Per-layer padded feature dims, inferred from the packed weights.
    d_pads = [w_list[0].shape[0]] + [w.shape[1] for w in w_list]
    assert K <= d_pads[0]
    d_out_pad = d_pads[-1]

    # Feature-dim zero pad only (padded weight rows are zero -> exact result).
    x_p = x if K == d_pads[0] else jnp.pad(x, ((0, 0), (0, d_pads[0] - K)))

    # Batch tiling: balanced tiles; >= 2 grid steps when M >= 16 so the
    # "parallel" axis shards across v7x's two TensorCores.
    n_tiles = pl.cdiv(M, tile_m)
    if M >= 16:
        n_tiles = max(n_tiles, 2)
    tm = min(tile_m, _round_up(pl.cdiv(M, n_tiles), 8))
    if tm > M:
        tm = M                        # single full-extent block (always legal)
    grid_m = pl.cdiv(M, tm)

    # Activations tiled over M; weights/biases resident (constant index map)
    # and single-buffered (grid-invariant -> double-buffering buys nothing).
    in_specs = [pl.BlockSpec((tm, d_pads[0]), lambda i: (i, 0))]
    params_flat = []
    for l in range(L):
        in_specs.append(pl.BlockSpec((d_pads[l], d_pads[l + 1]),
                                     lambda i: (0, 0),
                                     pipeline_mode=pl.Buffered(1)))
        in_specs.append(pl.BlockSpec((1, d_pads[l + 1]),
                                     lambda i: (0, 0),
                                     pipeline_mode=pl.Buffered(1)))
        params_flat += [w_list[l], b_list[l]]

    # Explicit VMEM budget: resident params + double-buffered act in/out
    # blocks + live f32 intermediates + headroom.
    itemsize = x.dtype.itemsize
    param_bytes = sum(int(p.size) * p.dtype.itemsize for p in params_flat)
    act_bytes = (2 * tm * (d_pads[0] + d_out_pad) * itemsize
                 + 2 * tm * max(d_pads) * 4)
    vmem_limit = int(min(max(param_bytes + act_bytes + (4 << 20), 32 << 20),
                         128 << 20))

    kernel = functools.partial(_mlp_fused_kernel, num_layers=L)
    out = pl.pallas_call(
        kernel,
        out_shape=jax.ShapeDtypeStruct((M, d_out_pad), x.dtype),
        grid_spec=pltpu.PrefetchScalarGridSpec(
            num_scalar_prefetch=0,
            grid=(grid_m,),
            in_specs=in_specs,
            out_specs=pl.BlockSpec((tm, d_out_pad), lambda i: (i, 0)),
        ),
        compiler_params=pltpu.CompilerParams(
            dimension_semantics=("parallel",),        # M-axis shards across TCs
            vmem_limit_bytes=vmem_limit,
        ),
    )(x_p, *params_flat)
    return out[:, :dim_out]


# jitted wrapper: dim_out / tile_m are static.
mlp_forward = jax.jit(mlp_forward_fused, static_argnums=(3,),
                      static_argnames=("tile_m",))


# ----------------------------------------------------------------------------
# Parameter init (PyTorch-layout) and one-time packing for the fused kernel.
# ----------------------------------------------------------------------------
def init_mlp_params(key, dim_in, dim_out, dim_hidden, num_layers,
                    bias=True, weight_norm=False):
    """Returns list of (weight (out_dim, in_dim), bias (out_dim,)) per layer,
    matching nn.Linear default init / the module's optional weight_norm init
    (which in the reference module only changes the init, not the forward)."""
    params = []
    for l in range(num_layers):
        in_dim = dim_in if l == 0 else dim_hidden
        out_dim = dim_out if l == num_layers - 1 else dim_hidden
        key, kw, kb = jax.random.split(key, 3)
        if weight_norm:
            w = 0.1 * jax.random.normal(kw, (out_dim, in_dim), jnp.float32)
            b = jnp.zeros((out_dim,), jnp.float32)
        else:
            bound = 1.0 / (in_dim ** 0.5)
            w = jax.random.uniform(kw, (out_dim, in_dim), jnp.float32, -bound, bound)
            b = jax.random.uniform(kb, (out_dim,), jnp.float32, -bound, bound)
        params.append((w, b if bias else jnp.zeros((out_dim,), jnp.float32)))
    return params


def pack_mlp_params(params, lane=128, param_dtype=jnp.float32):
    """One-time: transpose each weight to (in, out) layout and zero-pad each
    feature dim independently to a multiple of `lane` (128).  Padded rows/cols
    and padded bias lanes are zero, so bias-add / ReLU cannot contaminate real
    outputs.  param_dtype=jnp.bfloat16 halves weight VMEM/DMA and unlocks full
    MXU rate on v5e/v6e/v7x (biases stay f32)."""
    w_list, b_list = [], []
    for (w, b) in params:
        out_dim, in_dim = w.shape
        ip, op = _round_up(in_dim, lane), _round_up(out_dim, lane)
        wp = jnp.zeros((ip, op), param_dtype).at[:in_dim, :out_dim].set(
            jnp.transpose(w).astype(param_dtype))
        bp = jnp.zeros((1, op), jnp.float32).at[0, :out_dim].set(b)
        w_list.append(wp)
        b_list.append(bp)
    return w_list, b_list


# ----------------------------------------------------------------------------
# Pure-JAX reference.
# ----------------------------------------------------------------------------
def mlp_reference(x, params):
    h = x
    for l, (w, b) in enumerate(params):
        h = h @ w.T + b
        if l != len(params) - 1:
            h = jnp.maximum(h, 0.0)
    return h


if __name__ == "__main__":
    batch = 8
    dim_in, dim_hidden, dim_out, num_layers = 16, 32, 4, 3

    key = jax.random.PRNGKey(0)
    key, kx = jax.random.split(key)
    x = jax.random.normal(kx, (batch, dim_in), jnp.float32)

    params = init_mlp_params(key, dim_in, dim_out, dim_hidden, num_layers,
                             bias=True, weight_norm=False)
    w_list, b_list = pack_mlp_params(params)          # default: f32, exact numerics

    out = mlp_forward(x, w_list, b_list, dim_out)
    out = jax.block_until_ready(out)

    ref = mlp_reference(x, params)
    assert out.shape == (batch, dim_out)
    assert jnp.allclose(out, ref, atol=1e-5, rtol=1e-5)

    print("KERNEL_OK")
</pallas_src>

<mosaic_0001>
module attributes {stable_mosaic.version = 11 : i64} {
  func.func @_mlp_fused_kernel(%arg0: i32, %arg1: memref<8x128xf32, #tpu.memory_space<vmem>>, %arg2: memref<128x128xf32, #tpu.memory_space<vmem>>, %arg3: memref<1x128xf32, #tpu.memory_space<vmem>>, %arg4: memref<128x128xf32, #tpu.memory_space<vmem>>, %arg5: memref<1x128xf32, #tpu.memory_space<vmem>>, %arg6: memref<128x128xf32, #tpu.memory_space<vmem>>, %arg7: memref<1x128xf32, #tpu.memory_space<vmem>>, %arg8: memref<8x128xf32, #tpu.memory_space<vmem>>) attributes {dimension_semantics = [#tpu.dimension_semantics<parallel>], iteration_bounds = array<i64: 1>, scalar_prefetch = 0 : i64, scratch_operands = 0 : i64, tpu.core_type = #tpu.core_type<tc>, window_params = [{transform_indices = @transform_0, window_bounds = array<i64: 8, 128>}, {pipeline_mode = #tpu.pipeline_mode<synchronous>, transform_indices = @transform_1, window_bounds = array<i64: 128, 128>}, {pipeline_mode = #tpu.pipeline_mode<synchronous>, transform_indices = @transform_2, window_bounds = array<i64: 1, 128>}, {pipeline_mode = #tpu.pipeline_mode<synchronous>, transform_indices = @transform_3, window_bounds = array<i64: 128, 128>}, {pipeline_mode = #tpu.pipeline_mode<synchronous>, transform_indices = @transform_4, window_bounds = array<i64: 1, 128>}, {pipeline_mode = #tpu.pipeline_mode<synchronous>, transform_indices = @transform_5, window_bounds = array<i64: 128, 128>}, {pipeline_mode = #tpu.pipeline_mode<synchronous>, transform_indices = @transform_6, window_bounds = array<i64: 1, 128>}, {transform_indices = @transform_7, window_bounds = array<i64: 8, 128>}]} {
    %c0 = arith.constant 0 : index
    %c0_0 = arith.constant 0 : index
    %0 = vector.load %arg1[%c0, %c0_0] : memref<8x128xf32, #tpu.memory_space<vmem>>, vector<8x128xf32>
    %c0_1 = arith.constant 0 : index
    %c0_2 = arith.constant 0 : index
    %1 = vector.load %arg2[%c0_1, %c0_2] : memref<128x128xf32, #tpu.memory_space<vmem>>, vector<128x128xf32>
    %cst = arith.constant dense<0.000000e+00> : vector<8x128xf32>
    %2 = tpu.matmul %0, %1, %cst {dimension_numbers = #tpu.dot_dimension_numbers<[1], [0], [0], [1], [0, 0, 1, 1], [], []>} : vector<8x128xf32>, vector<128x128xf32>, vector<8x128xf32> -> vector<8x128xf32>
    %c0_3 = arith.constant 0 : index
    %c0_4 = arith.constant 0 : index
    %3 = vector.load %arg3[%c0_3, %c0_4] : memref<1x128xf32, #tpu.memory_space<vmem>>, vector<1x128xf32>
    %4 = vector.broadcast %3 : vector<1x128xf32> to vector<8x128xf32>
    %5 = arith.addf %2, %4 : vector<8x128xf32>
    %cst_5 = arith.constant 0.000000e+00 : f32
    %6 = vector.broadcast %cst_5 : f32 to vector<8x128xf32>
    %7 = arith.maximumf %5, %6 : vector<8x128xf32>
    %c0_6 = arith.constant 0 : index
    %c0_7 = arith.constant 0 : index
    %8 = vector.load %arg4[%c0_6, %c0_7] : memref<128x128xf32, #tpu.memory_space<vmem>>, vector<128x128xf32>
    %cst_8 = arith.constant dense<0.000000e+00> : vector<8x128xf32>
    %9 = tpu.matmul %7, %8, %cst_8 {dimension_numbers = #tpu.dot_dimension_numbers<[1], [0], [0], [1], [0, 0, 1, 1], [], []>} : vector<8x128xf32>, vector<128x128xf32>, vector<8x128xf32> -> vector<8x128xf32>
    %c0_9 = arith.constant 0 : index
    %c0_10 = arith.constant 0 : index
    %10 = vector.load %arg5[%c0_9, %c0_10] : memref<1x128xf32, #tpu.memory_space<vmem>>, vector<1x128xf32>
    %11 = vector.broadcast %10 : vector<1x128xf32> to vector<8x128xf32>
    %12 = arith.addf %9, %11 : vector<8x128xf32>
    %cst_11 = arith.constant 0.000000e+00 : f32
    %13 = vector.broadcast %cst_11 : f32 to vector<8x128xf32>
    %14 = arith.maximumf %12, %13 : vector<8x128xf32>
    %c0_12 = arith.constant 0 : index
    %c0_13 = arith.constant 0 : index
    %15 = vector.load %arg6[%c0_12, %c0_13] : memref<128x128xf32, #tpu.memory_space<vmem>>, vector<128x128xf32>
    %cst_14 = arith.constant dense<0.000000e+00> : vector<8x128xf32>
    %16 = tpu.matmul %14, %15, %cst_14 {dimension_numbers = #tpu.dot_dimension_numbers<[1], [0], [0], [1], [0, 0, 1, 1], [], []>} : vector<8x128xf32>, vector<128x128xf32>, vector<8x128xf32> -> vector<8x128xf32>
    %c0_15 = arith.constant 0 : index
    %c0_16 = arith.constant 0 : index
    %17 = vector.load %arg7[%c0_15, %c0_16] : memref<1x128xf32, #tpu.memory_space<vmem>>, vector<1x128xf32>
    %18 = vector.broadcast %17 : vector<1x128xf32> to vector<8x128xf32>
    %19 = arith.addf %16, %18 : vector<8x128xf32>
    %c0_17 = arith.constant 0 : index
    %c0_18 = arith.constant 0 : index
    %20 = vector.load %arg8[%c0_17, %c0_18] : memref<8x128xf32, #tpu.memory_space<vmem>>, vector<8x128xf32>
    tpu.vector_store %arg8[%c0_17, %c0_18], %19 {strides = array<i32>} : memref<8x128xf32, #tpu.memory_space<vmem>>, vector<8x128xf32>,
    return
  }
  func.func @transform_0(%arg0: i32) -> (i32, i32) {
    %c0_i32 = arith.constant 0 : i32
    %c0_i32_0 = arith.constant 0 : i32
    return %arg0, %c0_i32 : i32, i32
  }
  func.func @transform_1(%arg0: i32) -> (i32, i32) {
    %c0_i32 = arith.constant 0 : i32
    %c0_i32_0 = arith.constant 0 : i32
    %c0_i32_1 = arith.constant 0 : i32
    return %c0_i32, %c0_i32_0 : i32, i32
  }
  func.func @transform_2(%arg0: i32) -> (i32, i32) {
    %c0_i32 = arith.constant 0 : i32
    %c0_i32_0 = arith.constant 0 : i32
    %c0_i32_1 = arith.constant 0 : i32
    return %c0_i32, %c0_i32_0 : i32, i32
  }
  func.func @transform_3(%arg0: i32) -> (i32, i32) {
    %c0_i32 = arith.constant 0 : i32
    %c0_i32_0 = arith.constant 0 : i32
    %c0_i32_1 = arith.constant 0 : i32
    return %c0_i32, %c0_i32_0 : i32, i32
  }
  func.func @transform_4(%arg0: i32) -> (i32, i32) {
    %c0_i32 = arith.constant 0 : i32
    %c0_i32_0 = arith.constant 0 : i32
    %c0_i32_1 = arith.constant 0 : i32
    return %c0_i32, %c0_i32_0 : i32, i32
  }
  func.func @transform_5(%arg0: i32) -> (i32, i32) {
    %c0_i32 = arith.constant 0 : i32
    %c0_i32_0 = arith.constant 0 : i32
    %c0_i32_1 = arith.constant 0 : i32
    return %c0_i32, %c0_i32_0 : i32, i32
  }
  func.func @transform_6(%arg0: i32) -> (i32, i32) {
    %c0_i32 = arith.constant 0 : i32
    %c0_i32_0 = arith.constant 0 : i32
    %c0_i32_1 = arith.constant 0 : i32
    return %c0_i32, %c0_i32_0 : i32, i32
  }
  func.func @transform_7(%arg0: i32) -> (i32, i32) {
    %c0_i32 = arith.constant 0 : i32
    %c0_i32_0 = arith.constant 0 : i32
    return %arg0, %c0_i32 : i32, i32
  }
}

</mosaic_0001>

<llo_original>
// kernel: mlp_forward_fused.1
$region0: #{mlp_forward_fused.1}
  #allocation0 [shape = 'u32[]', space=smem, size = 0x4, offset = 0x4, fixed_abs, tag = 'smem constant byte address 0x4 - core index']
  #allocation1 [shape = 'u32[144,128]{1,0:T(1,128)}', space=vmem, size = 0x12000, scoped, tag = 'internal scratch']
  %s0 = inlined_call_operand.vmem [shape: f32[8,128], index: 0, kind: input, shape index: {}]
  %s1 = inlined_call_operand.hbm [shape: f32[128,128], index: 1, kind: input, shape index: {}]
  %s2 = inlined_call_operand.vmem [shape: f32[1,128], index: 2, kind: input, shape index: {}]
  %s3 = inlined_call_operand.hbm [shape: f32[128,128], index: 3, kind: input, shape index: {}]
  %s4 = inlined_call_operand.vmem [shape: f32[1,128], index: 4, kind: input, shape index: {}]
  %s5 = inlined_call_operand.hbm [shape: f32[128,128], index: 5, kind: input, shape index: {}]
  %s6 = inlined_call_operand.vmem [shape: f32[1,128], index: 6, kind: input, shape index: {}]
  %s7 = inlined_call_operand.vmem [shape: f32[8,128], index: 7, kind: output, shape index: {}]
  %s8 = sld [smem:[#allocation0]]
  $region50: #{mlp_forward_fused.1} parent=0
    _
  %s10 = ssub.s32 1, %s8
  %s11 = scalar_select 0, %s10, %s8
  $region1: #{mlp_forward_fused.1} parent=0
    #allocation2 [shape = 'u8[65536]{0}', space=vmem, size = 0x10000, scoped, tag = 'input window, operand 1, single buffered']
    #allocation3 [shape = 's32[1]{0}', space=sflag, size = 0x4, scoped, tag = 'scoped memory for mlp_forward_fused.1']
    #allocation4 [shape = 'u8[65536]{0}', space=vmem, size = 0x10000, scoped, tag = 'input window, operand 3, single buffered']
    #allocation5 [shape = 's32[1]{0}', space=sflag, size = 0x4, scoped, tag = 'scoped memory for mlp_forward_fused.1']
    #allocation6 [shape = 'u8[65536]{0}', space=vmem, size = 0x10000, scoped, tag = 'input window, operand 5, single buffered']
    %12 = vsyncpa [#allocation3], 0
    %13 = vsyncpa [#allocation5], 0
    // Predicated region
    $region2: #{mlp_forward_fused.1} parent=1 // pred_check
      _
    $region3: #{mlp_forward_fused.1} parent=1 // pred_check_branch
      %15 = sbr.rel (0) target = $region5
    $region4: #{mlp_forward_fused.1} parent=1 // pred_region
      _
    $region5: #{mlp_forward_fused.1} parent=1 // pred_fallthru
      _
    // Predicated region
    $region6: #{mlp_forward_fused.1} parent=1 // pred_check
      _
    $region7: #{mlp_forward_fused.1} parent=1 // pred_check_branch
      %17 = sbr.rel (0) target = $region9
    $region8: #{mlp_forward_fused.1} parent=1 // pred_region
      %s19 = ssub.s32 2048, 2048
      %20 = vsyncadd [#allocation3], %s19
      %s21 = sshll.u32 [#allocation2], 4
      %s22 = int_to_ptr.vmem [resolvable:$true] %s21
      %27 = dma.hbm_to_vmem [thread:$0]  %s1, 2048, %s22, [#allocation3], 128, 128, 8
    $region9: #{mlp_forward_fused.1} parent=1 // pred_fallthru
      _
    // Predicated region
    $region10: #{mlp_forward_fused.1} parent=1 // pred_check
      _
    $region11: #{mlp_forward_fused.1} parent=1 // pred_check_branch
      %29 = sbr.rel (0) target = $region13
    $region12: #{mlp_forward_fused.1} parent=1 // pred_region
      _
    $region13: #{mlp_forward_fused.1} parent=1 // pred_fallthru
      _
    // Predicated region
    $region14: #{mlp_forward_fused.1} parent=1 // pred_check
      _
    $region15: #{mlp_forward_fused.1} parent=1 // pred_check_branch
      %31 = sbr.rel (0) target = $region17
    $region16: #{mlp_forward_fused.1} parent=1 // pred_region
      %s33 = ssub.s32 2048, 2048
      %34 = vsyncadd [#allocation5], %s33
      %s35 = sshll.u32 [#allocation4], 4
      %s36 = int_to_ptr.vmem [resolvable:$true] %s35
      %41 = dma.hbm_to_vmem [thread:$0]  %s3, 2048, %s36, [#allocation5], 128, 128, 8
    $region17: #{mlp_forward_fused.1} parent=1 // pred_fallthru
      _
    // Predicated region
    $region18: #{mlp_forward_fused.1} parent=1 // pred_check
      _
    $region19: #{mlp_forward_fused.1} parent=1 // pred_check_branch
      %43 = sbr.rel (0) target = $region21
    $region20: #{mlp_forward_fused.1} parent=1 // pred_region
      _
    $region21: #{mlp_forward_fused.1} parent=1 // pred_fallthru
      _
    // Predicated region
    $region22: #{mlp_forward_fused.1} parent=1 // pred_check
      _
    $region23: #{mlp_forward_fused.1} parent=1 // pred_check_branch
      %45 = sbr.rel (0) target = $region25
    $region24: #{mlp_forward_fused.1} parent=1 // pred_region
      %s47 = ssub.s32 2048, 2048
      %48 = vsyncadd [#allocation5], %s47
      %s49 = sshll.u32 [#allocation6], 4
      %s50 = int_to_ptr.vmem [resolvable:$true] %s49
      %55 = dma.hbm_to_vmem [thread:$0]  %s5, 2048, %s50, [#allocation5], 128, 128, 8
    $region25: #{mlp_forward_fused.1} parent=1 // pred_fallthru
      _
    // Predicated region
    $region26: #{mlp_forward_fused.1} parent=1 // pred_check
      _
    $region27: #{mlp_forward_fused.1} parent=1 // pred_check_branch
      %57 = sbr.rel (0) target = $region29
    $region28: #{mlp_forward_fused.1} parent=1 // pred_region
      _
    $region29: #{mlp_forward_fused.1} parent=1 // pred_fallthru
      _
    // Predicated region
    $region30: #{mlp_forward_fused.1} parent=1 // pred_check
      _
    $region31: #{mlp_forward_fused.1} parent=1 // pred_check_branch
      %59 = sbr.rel (0) target = $region33
    $region32: #{mlp_forward_fused.1} parent=1 // pred_region
      %60 = dma.done [#allocation3], 2048
    $region33: #{mlp_forward_fused.1} parent=1 // pred_fallthru
      _
    // Predicated region
    $region34: #{mlp_forward_fused.1} parent=1 // pred_check
      _
    $region35: #{mlp_forward_fused.1} parent=1 // pred_check_branch
      %62 = sbr.rel (0) target = $region37
    $region36: #{mlp_forward_fused.1} parent=1 // pred_region
      %63 = dma.done [#allocation5], 2048
    $region37: #{mlp_forward_fused.1} parent=1 // pred_fallthru
      _
    // Predicated region
    $region38: #{mlp_forward_fused.1} parent=1 // pred_check
      _
    $region39: #{mlp_forward_fused.1} parent=1 // pred_check_branch
      %65 = sbr.rel (0) target = $region41
    $region40: #{mlp_forward_fused.1} parent=1 // pred_region
      %66 = dma.done [#allocation5], 2048
    $region41: #{mlp_forward_fused.1} parent=1 // pred_fallthru
      _
    %v67 = vld [vmem:[%s0] sm:$0xff]
    %v68 = vld [vmem:[#allocation2] sm:$0xff]
    %v69 = vld [vmem:[#allocation2 + $0x8] sm:$0xff]
    %v70 = vld [vmem:[#allocation2 + $0x10] sm:$0xff]
    %v71 = vld [vmem:[#allocation2 + $0x18] sm:$0xff]
    %v72 = vld [vmem:[#allocation2 + $0x20] sm:$0xff]
    %v73 = vld [vmem:[#allocation2 + $0x28] sm:$0xff]
    %v74 = vld [vmem:[#allocation2 + $0x30] sm:$0xff]
    %v75 = vld [vmem:[#allocation2 + $0x38] sm:$0xff]
    %v76 = vld [vmem:[#allocation2 + $0x40] sm:$0xff]
    %v77 = vld [vmem:[#allocation2 + $0x48] sm:$0xff]
    %v78 = vld [vmem:[#allocation2 + $0x50] sm:$0xff]
    %v79 = vld [vmem:[#allocation2 + $0x58] sm:$0xff]
    %v80 = vld [vmem:[#allocation2 + $0x60] sm:$0xff]
    %v81 = vld [vmem:[#allocation2 + $0x68] sm:$0xff]
    %v82 = vld [vmem:[#allocation2 + $0x70] sm:$0xff]
    %v83 = vld [vmem:[#allocation2 + $0x78] sm:$0xff]
    %v84 = vld [vmem:[%s2] sm:$0x1]
    %v86 = vlaneseq
    %v87 = vshrl.u32 %v86, 7
    %v88 = vsub.s32 0, %v87
    %v89 = vrot.slane %v84, %v88
    %91 = vmatprep.subr.mxu0 0.0
    %92 = vmatpush1.msra.mxu0 %v83
    %93 = vmatprep.subr.mxu0 0.0
    %94 = vmatpush1.msra.mxu0 %v82
    %95 = vmatprep.subr.mxu0 0.0
    %96 = vmatpush1.msra.mxu0 %v81
    %97 = vmatprep.subr.mxu0 0.0
    %98 = vmatpush1.msra.mxu0 %v80
    %99 = vmatprep.subr.mxu0 0.0
    %100 = vmatpush1.msra.mxu0 %v79
    %101 = vmatprep.subr.mxu0 0.0
    %102 = vmatpush1.msra.mxu0 %v78
    %103 = vmatprep.subr.mxu0 0.0
    %104 = vmatpush1.msra.mxu0 %v77
    %105 = vmatprep.subr.mxu0 0.0
    %106 = vmatpush1.msra.mxu0 %v76
    %107 = vmatprep.subr.mxu0 0.0
    %108 = vmatpush1.msra.mxu0 %v75
    %109 = vmatprep.subr.mxu0 0.0
    %110 = vmatpush1.msra.mxu0 %v74
    %111 = vmatprep.subr.mxu0 0.0
    %112 = vmatpush1.msra.mxu0 %v73
    %113 = vmatprep.subr.mxu0 0.0
    %114 = vmatpush1.msra.mxu0 %v72
    %115 = vmatprep.subr.mxu0 0.0
    %116 = vmatpush1.msra.mxu0 %v71
    %117 = vmatprep.subr.mxu0 0.0
    %118 = vmatpush1.msra.mxu0 %v70
    %119 = vmatprep.subr.mxu0 0.0
    %120 = vmatpush1.msra.mxu0 %v69
    %121 = vmatprep.subr.mxu0 0.0
    %122 = vmatpush1.msra.mxu0 %v68
    %123 = vmatprep.subr.mxu0 0.0
    %124 = vmatpush2.msra.mxu0 0.0
    %125 = vmatprep.subr.mxu0 0.0
    %126 = vmatpush2.msra.mxu0 0.0
    %127 = vmatprep.subr.mxu0 0.0
    %128 = vmatpush2.msra.mxu0 0.0
    %129 = vmatprep.subr.mxu0 0.0
    %130 = vmatpush2.msra.mxu0 0.0
    %131 = vmatprep.subr.mxu0 0.0
    %132 = vmatpush2.msra.mxu0 0.0
    %133 = vmatprep.subr.mxu0 0.0
    %134 = vmatpush2.msra.mxu0 0.0
    %135 = vmatprep.subr.mxu0 0.0
    %136 = vmatpush2.msra.mxu0 0.0
    %137 = vmatprep.subr.mxu0 0.0
    %138 = vmatpush2.msra.mxu0 0.0
    %139 = vmatprep.subr.mxu0 0.0
    %140 = vmatpush2.msra.mxu0 0.0
    %141 = vmatprep.subr.mxu0 0.0
    %142 = vmatpush2.msra.mxu0 0.0
    %143 = vmatprep.subr.mxu0 0.0
    %144 = vmatpush2.msra.mxu0 0.0
    %145 = vmatprep.subr.mxu0 0.0
    %146 = vmatpush2.msra.mxu0 0.0
    %147 = vmatprep.subr.mxu0 0.0
    %148 = vmatpush2.msra.mxu0 0.0
    %149 = vmatprep.subr.mxu0 0.0
    %150 = vmatpush2.msra.mxu0 0.0
    %151 = vmatprep.subr.mxu0 0.0
    %152 = vmatpush2.msra.mxu0 0.0
    %153 = vmatprep.subr.mxu0 0.0
    %154 = vmatpush2.msra.mxu0 0.0
    %155 = vmatprep.mubr.f32.mxu0 0.0
    %156 = vmatmul.mubr.f32.gmra.mxu0 %v67
    %v157 = vpop.f32.mrf.mxu0
    %v158 = vadd.f32 %v89, %v157
    %v159 = vpop.f32.mrf.mxu0
    %160 = vdwg.mxu0
    %v161 = vmax.f32 %v158, 0.0
    %v162 = vld [vmem:[#allocation4] sm:$0xff]
    %v163 = vld [vmem:[#allocation4 + $0x8] sm:$0xff]
    %v164 = vld [vmem:[#allocation4 + $0x10] sm:$0xff]
    %v165 = vld [vmem:[#allocation4 + $0x18] sm:$0xff]
    %v166 = vld [vmem:[#allocation4 + $0x20] sm:$0xff]
    %v167 = vld [vmem:[#allocation4 + $0x28] sm:$0xff]
    %v168 = vld [vmem:[#allocation4 + $0x30] sm:$0xff]
    %v169 = vld [vmem:[#allocation4 + $0x38] sm:$0xff]
    %v170 = vld [vmem:[#allocation4 + $0x40] sm:$0xff]
    %v171 = vld [vmem:[#allocation4 + $0x48] sm:$0xff]
    %v172 = vld [vmem:[#allocation4 + $0x50] sm:$0xff]
    %v173 = vld [vmem:[#allocation4 + $0x58] sm:$0xff]
    %v174 = vld [vmem:[#allocation4 + $0x60] sm:$0xff]
    %v175 = vld [vmem:[#allocation4 + $0x68] sm:$0xff]
    %v176 = vld [vmem:[#allocation4 + $0x70] sm:$0xff]
    %v177 = vld [vmem:[#allocation4 + $0x78] sm:$0xff]
    %v178 = vld [vmem:[%s4] sm:$0x1]
    %v180 = vlaneseq
    %v181 = vshrl.u32 %v180, 7
    %v182 = vsub.s32 0, %v181
    %v183 = vrot.slane %v178, %v182
    %185 = vmatprep.subr.mxu0 0.0
    %186 = vmatpush1.msra.mxu0 %v177
    %187 = vmatprep.subr.mxu0 0.0
    %188 = vmatpush1.msra.mxu0 %v176
    %189 = vmatprep.subr.mxu0 0.0
    %190 = vmatpush1.msra.mxu0 %v175
    %191 = vmatprep.subr.mxu0 0.0
    %192 = vmatpush1.msra.mxu0 %v174
    %193 = vmatprep.subr.mxu0 0.0
    %194 = vmatpush1.msra.mxu0 %v173
    %195 = vmatprep.subr.mxu0 0.0
    %196 = vmatpush1.msra.mxu0 %v172
    %197 = vmatprep.subr.mxu0 0.0
    %198 = vmatpush1.msra.mxu0 %v171
    %199 = vmatprep.subr.mxu0 0.0
    %200 = vmatpush1.msra.mxu0 %v170
    %201 = vmatprep.subr.mxu0 0.0
    %202 = vmatpush1.msra.mxu0 %v169
    %203 = vmatprep.subr.mxu0 0.0
    %204 = vmatpush1.msra.mxu0 %v168
    %205 = vmatprep.subr.mxu0 0.0
    %206 = vmatpush1.msra.mxu0 %v167
    %207 = vmatprep.subr.mxu0 0.0
    %208 = vmatpush1.msra.mxu0 %v166
    %209 = vmatprep.subr.mxu0 0.0
    %210 = vmatpush1.msra.mxu0 %v165
    %211 = vmatprep.subr.mxu0 0.0
    %212 = vmatpush1.msra.mxu0 %v164
    %213 = vmatprep.subr.mxu0 0.0
    %214 = vmatpush1.msra.mxu0 %v163
    %215 = vmatprep.subr.mxu0 0.0
    %216 = vmatpush1.msra.mxu0 %v162
    %217 = vmatprep.subr.mxu0 0.0
    %218 = vmatpush2.msra.mxu0 0.0
    %219 = vmatprep.subr.mxu0 0.0
    %220 = vmatpush2.msra.mxu0 0.0
    %221 = vmatprep.subr.mxu0 0.0
    %222 = vmatpush2.msra.mxu0 0.0
    %223 = vmatprep.subr.mxu0 0.0
    %224 = vmatpush2.msra.mxu0 0.0
    %225 = vmatprep.subr.mxu0 0.0
    %226 = vmatpush2.msra.mxu0 0.0
    %227 = vmatprep.subr.mxu0 0.0
    %228 = vmatpush2.msra.mxu0 0.0
    %229 = vmatprep.subr.mxu0 0.0
    %230 = vmatpush2.msra.mxu0 0.0
    %231 = vmatprep.subr.mxu0 0.0
    %232 = vmatpush2.msra.mxu0 0.0
    %233 = vmatprep.subr.mxu0 0.0
    %234 = vmatpush2.msra.mxu0 0.0
    %235 = vmatprep.subr.mxu0 0.0
    %236 = vmatpush2.msra.mxu0 0.0
    %237 = vmatprep.subr.mxu0 0.0
    %238 = vmatpush2.msra.mxu0 0.0
    %239 = vmatprep.subr.mxu0 0.0
    %240 = vmatpush2.msra.mxu0 0.0
    %241 = vmatprep.subr.mxu0 0.0
    %242 = vmatpush2.msra.mxu0 0.0
    %243 = vmatprep.subr.mxu0 0.0
    %244 = vmatpush2.msra.mxu0 0.0
    %245 = vmatprep.subr.mxu0 0.0
    %246 = vmatpush2.msra.mxu0 0.0
    %247 = vmatprep.subr.mxu0 0.0
    %248 = vmatpush2.msra.mxu0 0.0
    %249 = vmatprep.mubr.f32.mxu0 0.0
    %250 = vmatmul.mubr.f32.gmra.mxu0 %v161
    %v251 = vpop.f32.mrf.mxu0
    %v252 = vadd.f32 %v183, %v251
    %v253 = vpop.f32.mrf.mxu0
    %254 = vdwg.mxu0
    %v255 = vmax.f32 %v252, 0.0
    %v256 = vld [vmem:[#allocation6] sm:$0xff]
    %v257 = vld [vmem:[#allocation6 + $0x8] sm:$0xff]
    %v258 = vld [vmem:[#allocation6 + $0x10] sm:$0xff]
    %v259 = vld [vmem:[#allocation6 + $0x18] sm:$0xff]
    %v260 = vld [vmem:[#allocation6 + $0x20] sm:$0xff]
    %v261 = vld [vmem:[#allocation6 + $0x28] sm:$0xff]
    %v262 = vld [vmem:[#allocation6 + $0x30] sm:$0xff]
    %v263 = vld [vmem:[#allocation6 + $0x38] sm:$0xff]
    %v264 = vld [vmem:[#allocation6 + $0x40] sm:$0xff]
    %v265 = vld [vmem:[#allocation6 + $0x48] sm:$0xff]
    %v266 = vld [vmem:[#allocation6 + $0x50] sm:$0xff]
    %v267 = vld [vmem:[#allocation6 + $0x58] sm:$0xff]
    %v268 = vld [vmem:[#allocation6 + $0x60] sm:$0xff]
    %v269 = vld [vmem:[#allocation6 + $0x68] sm:$0xff]
    %v270 = vld [vmem:[#allocation6 + $0x70] sm:$0xff]
    %v271 = vld [vmem:[#allocation6 + $0x78] sm:$0xff]
    %v272 = vld [vmem:[%s6] sm:$0x1]
    %v274 = vlaneseq
    %v275 = vshrl.u32 %v274, 7
    %v276 = vsub.s32 0, %v275
    %v277 = vrot.slane %v272, %v276
    %279 = vmatprep.subr.mxu0 0.0
    %280 = vmatpush1.msra.mxu0 %v271
    %281 = vmatprep.subr.mxu0 0.0
    %282 = vmatpush1.msra.mxu0 %v270
    %283 = vmatprep.subr.mxu0 0.0
    %284 = vmatpush1.msra.mxu0 %v269
    %285 = vmatprep.subr.mxu0 0.0
    %286 = vmatpush1.msra.mxu0 %v268
    %287 = vmatprep.subr.mxu0 0.0
    %288 = vmatpush1.msra.mxu0 %v267
    %289 = vmatprep.subr.mxu0 0.0
    %290 = vmatpush1.msra.mxu0 %v266
    %291 = vmatprep.subr.mxu0 0.0
    %292 = vmatpush1.msra.mxu0 %v265
    %293 = vmatprep.subr.mxu0 0.0
    %294 = vmatpush1.msra.mxu0 %v264
    %295 = vmatprep.subr.mxu0 0.0
    %296 = vmatpush1.msra.mxu0 %v263
    %297 = vmatprep.subr.mxu0 0.0
    %298 = vmatpush1.msra.mxu0 %v262
    %299 = vmatprep.subr.mxu0 0.0
    %300 = vmatpush1.msra.mxu0 %v261
    %301 = vmatprep.subr.mxu0 0.0
    %302 = vmatpush1.msra.mxu0 %v260
    %303 = vmatprep.subr.mxu0 0.0
    %304 = vmatpush1.msra.mxu0 %v259
    %305 = vmatprep.subr.mxu0 0.0
    %306 = vmatpush1.msra.mxu0 %v258
    %307 = vmatprep.subr.mxu0 0.0
    %308 = vmatpush1.msra.mxu0 %v257
    %309 = vmatprep.subr.mxu0 0.0
    %310 = vmatpush1.msra.mxu0 %v256
    %311 = vmatprep.subr.mxu0 0.0
    %312 = vmatpush2.msra.mxu0 0.0
    %313 = vmatprep.subr.mxu0 0.0
    %314 = vmatpush2.msra.mxu0 0.0
    %315 = vmatprep.subr.mxu0 0.0
    %316 = vmatpush2.msra.mxu0 0.0
    %317 = vmatprep.subr.mxu0 0.0
    %318 = vmatpush2.msra.mxu0 0.0
    %319 = vmatprep.subr.mxu0 0.0
    %320 = vmatpush2.msra.mxu0 0.0
    %321 = vmatprep.subr.mxu0 0.0
    %322 = vmatpush2.msra.mxu0 0.0
    %323 = vmatprep.subr.mxu0 0.0
    %324 = vmatpush2.msra.mxu0 0.0
    %325 = vmatprep.subr.mxu0 0.0
    %326 = vmatpush2.msra.mxu0 0.0
    %327 = vmatprep.subr.mxu0 0.0
    %328 = vmatpush2.msra.mxu0 0.0
    %329 = vmatprep.subr.mxu0 0.0
    %330 = vmatpush2.msra.mxu0 0.0
    %331 = vmatprep.subr.mxu0 0.0
    %332 = vmatpush2.msra.mxu0 0.0
    %333 = vmatprep.subr.mxu0 0.0
    %334 = vmatpush2.msra.mxu0 0.0
    %335 = vmatprep.subr.mxu0 0.0
    %336 = vmatpush2.msra.mxu0 0.0
    %337 = vmatprep.subr.mxu0 0.0
    %338 = vmatpush2.msra.mxu0 0.0
    %339 = vmatprep.subr.mxu0 0.0
    %340 = vmatpush2.msra.mxu0 0.0
    %341 = vmatprep.subr.mxu0 0.0
    %342 = vmatpush2.msra.mxu0 0.0
    %343 = vmatprep.mubr.f32.mxu0 0.0
    %344 = vmatmul.mubr.f32.gmra.mxu0 %v255
    %v345 = vpop.f32.mrf.mxu0
    %v346 = vadd.f32 %v277, %v345
    %v347 = vpop.f32.mrf.mxu0
    %348 = vdwg.mxu0
    %349 = vst [vmem:[%s7] sm:$0xff] %v346
    // Predicated region
    $region42: #{mlp_forward_fused.1} parent=1 // pred_check
      _
    $region43: #{mlp_forward_fused.1} parent=1 // pred_check_branch
      %351 = sbr.rel (0) target = $region45
    $region44: #{mlp_forward_fused.1} parent=1 // pred_region
      _
    $region45: #{mlp_forward_fused.1} parent=1 // pred_fallthru
      _
    // Predicated region
    $region46: #{mlp_forward_fused.1} parent=1 // pred_check
      _
    $region47: #{mlp_forward_fused.1} parent=1 // pred_check_branch
      %353 = sbr.rel (0) target = $region49
    $region48: #{mlp_forward_fused.1} parent=1 // pred_region
      _
    $region49: #{mlp_forward_fused.1} parent=1 // pred_fallthru
      _
    %354 = vsyncpa [#allocation3], 1
    %355 = vsyncpa [#allocation5], 1

</llo_original>
